<compile_context>
chip_gen: v7x
topology: tpu7x:2x2x1
jax: 0.10.0
libtpu: 0.0.40
codegen_flags: <defaults>
</compile_context>

<pallas_src>
import math

import jax
import jax.numpy as jnp
from jax.experimental import pallas as pl
from jax.experimental.pallas import tpu as pltpu


def _residual_1x1_kernel(w_ref, b_ref, x_ref, o_ref):
    # w_ref: (Cp, Cp) VMEM -- block-diagonal replicated 1x1-conv weight (f32)
    # b_ref: (Cp, 1)  VMEM -- replicated bias (f32)
    # x_ref / o_ref: (1, Cp, TL) VMEM tiles; TL is the lane (last) dim.
    x = x_ref[0].astype(jnp.float32)                       # (Cp, TL) slab, f32 compute
    mix = jnp.dot(
        w_ref[...], x,
        preferred_element_type=jnp.float32,
        precision=jax.lax.Precision.HIGHEST,               # keep f32 accuracy on MXU
    )                                                      # tiny K=Cp dot, fully hidden under DMA
    y = x + b_ref[...] + mix                               # residual + bias + conv, whole slab
    o_ref[0] = y.astype(o_ref.dtype)                       # ONE unmasked full-tile store


def _lane_tile(hw, c_pack, itemsize, target_bytes=4 * 1024 * 1024):
    """Full hw if it fits ~target_bytes, else the largest 128-multiple lane tile."""
    max_lanes = max(128, (target_bytes // (c_pack * itemsize)) // 128 * 128)
    if hw <= max_lanes:
        return hw                    # full-dim block (constraint-exempt), single lane tile
    return max_lanes                 # multiple of 128; cdiv grid masks only the tail tile


def residual_1x1conv(x_nchw, weight, bias):
    """out = Conv2d_1x1(x) + x, matching Residual(fn).forward(x)."""
    n, c, h, w = x_nchw.shape
    c_out, c_in = weight.shape
    assert c_in == c and c_out == c, "residual add requires matching channels"

    hw = h * w
    itemsize = jnp.dtype(x_nchw.dtype).itemsize

    # Pack `pack` images per tile so pack*C fills the sublane granule (8 f32 / 16 bf16).
    sub = 32 // itemsize
    pack = sub // math.gcd(sub, c)
    if pack < 1 or n % pack != 0:
        pack = 1                     # fallback: block still spans the full channel dim
    c_pack = pack * c
    groups = n // pack

    x3 = x_nchw.reshape(groups, c_pack, hw)      # free view: merges (pack, C) into sublanes

    # Block-diagonal replicated weight / bias: one dot mixes all packed images at once.
    w_big = jnp.kron(jnp.eye(pack, dtype=jnp.float32), weight.astype(jnp.float32))
    b_big = jnp.tile(bias.astype(jnp.float32), pack).reshape(c_pack, 1)

    tl = _lane_tile(hw, c_pack, itemsize)
    grid = (groups, pl.cdiv(hw, tl))

    flops = 2 * n * c * c * hw
    bytes_accessed = 2 * n * c * hw * itemsize + (w_big.size + b_big.size) * 4

    out3 = pl.pallas_call(
        _residual_1x1_kernel,
        out_shape=jax.ShapeDtypeStruct((groups, c_pack, hw), x_nchw.dtype),
        grid_spec=pltpu.PrefetchScalarGridSpec(
            num_scalar_prefetch=0,
            grid=grid,
            in_specs=[
                pl.BlockSpec((c_pack, c_pack), lambda gi, li: (0, 0)),   # resident weight
                pl.BlockSpec((c_pack, 1), lambda gi, li: (0, 0)),        # resident bias
                pl.BlockSpec((1, c_pack, tl), lambda gi, li: (gi, 0, li)),
            ],
            out_specs=pl.BlockSpec((1, c_pack, tl), lambda gi, li: (gi, 0, li)),
        ),
        compiler_params=pltpu.CompilerParams(
            dimension_semantics=("parallel", "parallel"),
            # ~16 MiB actually used (2 bufs x (in+out) @ ~4 MiB blocks); 40 MiB budget
            # is safe on v7x (64 MiB physical) and leaves headroom on v5e/v6e (128 MiB).
            vmem_limit_bytes=40 * 1024 * 1024,
        ),
        cost_estimate=pl.CostEstimate(
            flops=flops, transcendentals=0, bytes_accessed=bytes_accessed),
    )(w_big, b_big, x3)

    return out3.reshape(n, c, h, w)


if __name__ == "__main__":
    key = jax.random.PRNGKey(0)
    kx, kw, kb = jax.random.split(key, 3)

    N, C, H, W = 2, 4, 16, 16
    x = jax.random.normal(kx, (N, C, H, W), dtype=jnp.float32)
    # deterministic synthetic Conv2d(C, C, kernel_size=1) parameters
    weight = jax.random.normal(kw, (C, C), dtype=jnp.float32) * 0.1
    bias = jax.random.normal(kb, (C,), dtype=jnp.float32) * 0.1

    out = residual_1x1conv(x, weight, bias)
    out = jax.block_until_ready(out)

    # plain-JAX reference: fn(x) + x with fn = 1x1 conv, in exact elementwise f32
    mix = (weight[None, :, :, None, None] * x[:, None, :, :, :]).sum(axis=2)
    ref = mix + bias[None, :, None, None] + x
    assert out.shape == (N, C, H, W)
    assert jnp.allclose(out, ref, atol=1e-5, rtol=1e-5)

    print("KERNEL_OK")
</pallas_src>

<mosaic_0001>
module attributes {stable_mosaic.version = 11 : i64} {
  func.func @_residual_1x1_kernel(%arg0: i32, %arg1: i32, %arg2: memref<8x8xf32, #tpu.memory_space<vmem>>, %arg3: memref<8x1xf32, #tpu.memory_space<vmem>>, %arg4: memref<1x8x256xf32, #tpu.memory_space<vmem>>, %arg5: memref<1x8x256xf32, #tpu.memory_space<vmem>>) attributes {dimension_semantics = [#tpu.dimension_semantics<parallel>, #tpu.dimension_semantics<parallel>], iteration_bounds = array<i64: 1, 1>, scalar_prefetch = 0 : i64, scratch_operands = 0 : i64, tpu.core_type = #tpu.core_type<tc>, window_params = [{pipeline_mode = #tpu.pipeline_mode<synchronous>, transform_indices = @transform_0, window_bounds = array<i64: 8, 8>}, {pipeline_mode = #tpu.pipeline_mode<synchronous>, transform_indices = @transform_1, window_bounds = array<i64: 8, 1>}, {transform_indices = @transform_2, window_bounds = array<i64: 1, 8, 256>}, {transform_indices = @transform_3, window_bounds = array<i64: 1, 8, 256>}]} {
    %c0 = arith.constant 0 : index
    %c0_0 = arith.constant 0 : index
    %c0_1 = arith.constant 0 : index
    %0 = vector.load %arg4[%c0, %c0_0, %c0_1] : memref<1x8x256xf32, #tpu.memory_space<vmem>>, vector<1x8x256xf32>
    %1 = vector.shape_cast %0 : vector<1x8x256xf32> to vector<8x256xf32>
    %c0_2 = arith.constant 0 : index
    %c0_3 = arith.constant 0 : index
    %2 = vector.load %arg2[%c0_2, %c0_3] : memref<8x8xf32, #tpu.memory_space<vmem>>, vector<8x8xf32>
    %cst = arith.constant dense<0.000000e+00> : vector<8x256xf32>
    %3 = tpu.matmul %2, %1, %cst {dimension_numbers = #tpu.dot_dimension_numbers<[1], [0], [0], [1], [0, 0, 1, 1], [], []>, precision = #tpu.contract_precision<fp32>} : vector<8x8xf32>, vector<8x256xf32>, vector<8x256xf32> -> vector<8x256xf32>
    %c0_4 = arith.constant 0 : index
    %c0_5 = arith.constant 0 : index
    %4 = vector.load %arg3[%c0_4, %c0_5] : memref<8x1xf32, #tpu.memory_space<vmem>>, vector<8x1xf32>
    %5 = vector.broadcast %4 : vector<8x1xf32> to vector<8x256xf32>
    %6 = arith.addf %1, %5 : vector<8x256xf32>
    %7 = arith.addf %6, %3 : vector<8x256xf32>
    %c0_6 = arith.constant 0 : index
    %c0_7 = arith.constant 0 : index
    %c0_8 = arith.constant 0 : index
    %8 = vector.load %arg5[%c0_6, %c0_7, %c0_8] : memref<1x8x256xf32, #tpu.memory_space<vmem>>, vector<1x8x256xf32>
    %9 = vector.shape_cast %8 : vector<1x8x256xf32> to vector<8x256xf32>
    %10 = vector.shape_cast %7 : vector<8x256xf32> to vector<1x8x256xf32>
    tpu.vector_store %arg5[%c0_6, %c0_7, %c0_8], %10 {strides = array<i32>} : memref<1x8x256xf32, #tpu.memory_space<vmem>>, vector<1x8x256xf32>,
    return
  }
  func.func @transform_0(%arg0: i32, %arg1: i32) -> (i32, i32) {
    %c0_i32 = arith.constant 0 : i32
    %c0_i32_0 = arith.constant 0 : i32
    %c0_i32_1 = arith.constant 0 : i32
    return %c0_i32, %c0_i32_0 : i32, i32
  }
  func.func @transform_1(%arg0: i32, %arg1: i32) -> (i32, i32) {
    %c0_i32 = arith.constant 0 : i32
    %c0_i32_0 = arith.constant 0 : i32
    %c0_i32_1 = arith.constant 0 : i32
    return %c0_i32, %c0_i32_0 : i32, i32
  }
  func.func @transform_2(%arg0: i32, %arg1: i32) -> (i32, i32, i32) {
    %c0_i32 = arith.constant 0 : i32
    %c0_i32_0 = arith.constant 0 : i32
    return %arg0, %c0_i32, %arg1 : i32, i32, i32
  }
  func.func @transform_3(%arg0: i32, %arg1: i32) -> (i32, i32, i32) {
    %c0_i32 = arith.constant 0 : i32
    %c0_i32_0 = arith.constant 0 : i32
    return %arg0, %c0_i32, %arg1 : i32, i32, i32
  }
}

</mosaic_0001>

<llo_original>
// kernel: tpu_custom_call.1
$region0: #{tpu_custom_call.1}
  #allocation0 [shape = 'u32[]', space=smem, size = 0x4, offset = 0x4, fixed_abs, tag = 'smem constant byte address 0x4 - core index']
  #allocation1 [shape = 'u32[144,128]{1,0:T(1,128)}', space=vmem, size = 0x12000, scoped, tag = 'internal scratch']
  %s0 = inlined_call_operand.hbm [shape: f32[8,8], index: 0, kind: input, shape index: {}]
  %s1 = inlined_call_operand.vmem [shape: f32[8,1], index: 1, kind: input, shape index: {}]
  %s2 = inlined_call_operand.vmem [shape: f32[1,8,256], index: 2, kind: input, shape index: {}]
  %s3 = inlined_call_operand.hbm [shape: f32[1,8,256], index: 3, kind: output, shape index: {}]
  %s4 = sld [smem:[#allocation0]]
  $region26: #{tpu_custom_call.1} parent=0
    _
  %s6 = ssub.s32 1, %s4
  %s7 = scalar_select 0, %s6, %s4
  $region1: #{tpu_custom_call.1} parent=0
    #allocation2 [shape = 'u8[4096]{0}', space=vmem, size = 0x1000, scoped, tag = 'input window, operand 0, single buffered']
    #allocation3 [shape = 's32[1]{0}', space=sflag, size = 0x4, scoped, tag = 'scoped memory for tpu_custom_call.1']
    #allocation4 [shape = 's32[1]{0}', space=sflag, size = 0x4, scoped, tag = 'scoped memory for tpu_custom_call.1']
    #allocation5 [shape = 'u8[8192]{0}', space=vmem, size = 0x2000, scoped, tag = 'output window, operand 0, single buffered']
    %8 = vsyncpa [#allocation3], 0
    %9 = vsyncpa [#allocation4], 0
    // Predicated region
    $region2: #{tpu_custom_call.1} parent=1 // pred_check
      _
    $region3: #{tpu_custom_call.1} parent=1 // pred_check_branch
      %11 = sbr.rel (0) target = $region5
    $region4: #{tpu_custom_call.1} parent=1 // pred_region
      %s13 = ssub.s32 128, 128
      %14 = vsyncadd [#allocation3], %s13
      %s16 = sshll.u32 [#allocation2], 4
      %s17 = int_to_ptr.vmem [resolvable:$true] %s16
      %19 = dma.hbm_to_vmem [thread:$0]  %s0, 128, %s17, [#allocation3]
    $region5: #{tpu_custom_call.1} parent=1 // pred_fallthru
      _
    // Predicated region
    $region6: #{tpu_custom_call.1} parent=1 // pred_check
      _
    $region7: #{tpu_custom_call.1} parent=1 // pred_check_branch
      %21 = sbr.rel (0) target = $region9
    $region8: #{tpu_custom_call.1} parent=1 // pred_region
      _
    $region9: #{tpu_custom_call.1} parent=1 // pred_fallthru
      _
    // Predicated region
    $region10: #{tpu_custom_call.1} parent=1 // pred_check
      _
    $region11: #{tpu_custom_call.1} parent=1 // pred_check_branch
      %23 = sbr.rel (0) target = $region13
    $region12: #{tpu_custom_call.1} parent=1 // pred_region
      _
    $region13: #{tpu_custom_call.1} parent=1 // pred_fallthru
      _
    // Predicated region
    $region14: #{tpu_custom_call.1} parent=1 // pred_check
      _
    $region15: #{tpu_custom_call.1} parent=1 // pred_check_branch
      %25 = sbr.rel (0) target = $region17
    $region16: #{tpu_custom_call.1} parent=1 // pred_region
      %26 = dma.done [#allocation3], 128
    $region17: #{tpu_custom_call.1} parent=1 // pred_fallthru
      _
    %v27 = vld [vmem:[%s2] sm:$0xff]
    %v28 = vld [vmem:[%s2 + $0x8] sm:$0xff]
    %v29 = vld [vmem:[#allocation2] sm:$0xff]
    %vm30 = vcmask 64512
    %v32 = vsel %vm30, %v29, 0
    %v34 = vand.u32 %v28, 4294901760
    %35 = vmatprep.subr.mxu0 %v34
    %v36 = vand.u32 %v27, 4294901760
    %37 = vmatpush1.msra.mxu0 %v36
    %38 = vmatprep.subr.mxu0 0.0
    %39 = vmatpush1.msra.mxu0 0.0
    %40 = vmatprep.subr.mxu0 0.0
    %41 = vmatpush1.msra.mxu0 0.0
    %42 = vmatprep.subr.mxu0 0.0
    %43 = vmatpush1.msra.mxu0 0.0
    %44 = vmatprep.subr.mxu0 0.0
    %45 = vmatpush1.msra.mxu0 0.0
    %46 = vmatprep.subr.mxu0 0.0
    %47 = vmatpush1.msra.mxu0 0.0
    %48 = vmatprep.subr.mxu0 0.0
    %49 = vmatpush1.msra.mxu0 0.0
    %50 = vmatprep.subr.mxu0 0.0
    %51 = vmatpush1.msra.mxu0 0.0
    %52 = vmatprep.subr.mxu0 0.0
    %53 = vmatpush1.msra.mxu0 0.0
    %54 = vmatprep.subr.mxu0 0.0
    %55 = vmatpush1.msra.mxu0 0.0
    %56 = vmatprep.subr.mxu0 0.0
    %57 = vmatpush1.msra.mxu0 0.0
    %58 = vmatprep.subr.mxu0 0.0
    %59 = vmatpush1.msra.mxu0 0.0
    %60 = vmatprep.subr.mxu0 0.0
    %61 = vmatpush1.msra.mxu0 0.0
    %62 = vmatprep.subr.mxu0 0.0
    %63 = vmatpush1.msra.mxu0 0.0
    %64 = vmatprep.subr.mxu0 0.0
    %65 = vmatpush1.msra.mxu0 0.0
    %66 = vmatprep.subr.mxu0 0.0
    %67 = vmatpush1.msra.mxu0 0.0
    %68 = vmatprep.subr.mxu0 0.0
    %69 = vmatpush1.msra.mxu0 0.0
    %70 = vmatprep.subr.mxu0 0.0
    %71 = vmatpush1.msra.mxu0 0.0
    %72 = vmatprep.subr.mxu0 0.0
    %73 = vmatpush1.msra.mxu0 0.0
    %74 = vmatprep.subr.mxu0 0.0
    %75 = vmatpush1.msra.mxu0 0.0
    %76 = vmatprep.subr.mxu0 0.0
    %77 = vmatpush1.msra.mxu0 0.0
    %78 = vmatprep.subr.mxu0 0.0
    %79 = vmatpush1.msra.mxu0 0.0
    %80 = vmatprep.subr.mxu0 0.0
    %81 = vmatpush1.msra.mxu0 0.0
    %82 = vmatprep.subr.mxu0 0.0
    %83 = vmatpush1.msra.mxu0 0.0
    %84 = vmatprep.subr.mxu0 0.0
    %85 = vmatpush1.msra.mxu0 0.0
    %86 = vmatprep.subr.mxu0 0.0
    %87 = vmatpush1.msra.mxu0 0.0
    %88 = vmatprep.subr.mxu0 0.0
    %89 = vmatpush1.msra.mxu0 0.0
    %90 = vmatprep.subr.mxu0 0.0
    %91 = vmatpush1.msra.mxu0 0.0
    %92 = vmatprep.subr.mxu0 0.0
    %93 = vmatpush1.msra.mxu0 0.0
    %94 = vmatprep.subr.mxu0 0.0
    %95 = vmatpush1.msra.mxu0 0.0
    %96 = vmatprep.subr.mxu0 0.0
    %97 = vmatpush1.msra.mxu0 0.0
    %98 = vmatprep.subr.mxu0 0.0
    %99 = vmatpush1.msra.mxu0 0.0
    %100 = vmatprep.mubr.f32.mxu0 0.0
    %v101 = vand.u32 %v32, 4294901760
    %v102 = vsub.f32 %v32, %v101
    %v103 = vand.u32 %v102, 4294901760
    %v104 = vsub.f32 %v102, %v103
    %v105 = vand.u32 %v104, 4294901760
    %106 = vmatmul.mubr.f32.gmra.mrb[0].mxu0 %v105
    %v107 = vpop.f32.mrb[0].mxu0
    %v108 = vadd.f32 0.0, %v107
    %v109 = vpop.f32.mrb[0].mxu0
    %v110 = vadd.f32 0.0, %v109
    %111 = vdwg.mxu0
    %v112 = vand.u32 %v28, 4294901760
    %v113 = vsub.f32 %v28, %v112
    %v114 = vand.u32 %v113, 4294901760
    %v115 = vsub.f32 %v113, %v114
    %v116 = vand.u32 %v115, 4294901760
    %117 = vmatprep.subr.mxu0 %v116
    %v118 = vand.u32 %v27, 4294901760
    %v119 = vsub.f32 %v27, %v118
    %v120 = vand.u32 %v119, 4294901760
    %v121 = vsub.f32 %v119, %v120
    %v122 = vand.u32 %v121, 4294901760
    %123 = vmatpush1.msra.mxu0 %v122
    %124 = vmatprep.subr.mxu0 0.0
    %125 = vmatpush1.msra.mxu0 0.0
    %126 = vmatprep.subr.mxu0 0.0
    %127 = vmatpush1.msra.mxu0 0.0
    %128 = vmatprep.subr.mxu0 0.0
    %129 = vmatpush1.msra.mxu0 0.0
    %130 = vmatprep.subr.mxu0 0.0
    %131 = vmatpush1.msra.mxu0 0.0
    %132 = vmatprep.subr.mxu0 0.0
    %133 = vmatpush1.msra.mxu0 0.0
    %134 = vmatprep.subr.mxu0 0.0
    %135 = vmatpush1.msra.mxu0 0.0
    %136 = vmatprep.subr.mxu0 0.0
    %137 = vmatpush1.msra.mxu0 0.0
    %138 = vmatprep.subr.mxu0 0.0
    %139 = vmatpush1.msra.mxu0 0.0
    %140 = vmatprep.subr.mxu0 0.0
    %141 = vmatpush1.msra.mxu0 0.0
    %142 = vmatprep.subr.mxu0 0.0
    %143 = vmatpush1.msra.mxu0 0.0
    %144 = vmatprep.subr.mxu0 0.0
    %145 = vmatpush1.msra.mxu0 0.0
    %146 = vmatprep.subr.mxu0 0.0
    %147 = vmatpush1.msra.mxu0 0.0
    %148 = vmatprep.subr.mxu0 0.0
    %149 = vmatpush1.msra.mxu0 0.0
    %150 = vmatprep.subr.mxu0 0.0
    %151 = vmatpush1.msra.mxu0 0.0
    %152 = vmatprep.subr.mxu0 0.0
    %153 = vmatpush1.msra.mxu0 0.0
    %154 = vmatprep.subr.mxu0 0.0
    %155 = vmatpush1.msra.mxu0 0.0
    %156 = vmatprep.subr.mxu0 0.0
    %157 = vmatpush1.msra.mxu0 0.0
    %158 = vmatprep.subr.mxu0 0.0
    %159 = vmatpush1.msra.mxu0 0.0
    %160 = vmatprep.subr.mxu0 0.0
    %161 = vmatpush1.msra.mxu0 0.0
    %162 = vmatprep.subr.mxu0 0.0
    %163 = vmatpush1.msra.mxu0 0.0
    %164 = vmatprep.subr.mxu0 0.0
    %165 = vmatpush1.msra.mxu0 0.0
    %166 = vmatprep.subr.mxu0 0.0
    %167 = vmatpush1.msra.mxu0 0.0
    %168 = vmatprep.subr.mxu0 0.0
    %169 = vmatpush1.msra.mxu0 0.0
    %170 = vmatprep.subr.mxu0 0.0
    %171 = vmatpush1.msra.mxu0 0.0
    %172 = vmatprep.subr.mxu0 0.0
    %173 = vmatpush1.msra.mxu0 0.0
    %174 = vmatprep.subr.mxu0 0.0
    %175 = vmatpush1.msra.mxu0 0.0
    %176 = vmatprep.subr.mxu0 0.0
    %177 = vmatpush1.msra.mxu0 0.0
    %178 = vmatprep.subr.mxu0 0.0
    %179 = vmatpush1.msra.mxu0 0.0
    %180 = vmatprep.subr.mxu0 0.0
    %181 = vmatpush1.msra.mxu0 0.0
    %182 = vmatprep.subr.mxu0 0.0
    %183 = vmatpush1.msra.mxu0 0.0
    %184 = vmatprep.subr.mxu0 0.0
    %185 = vmatpush1.msra.mxu0 0.0
    %186 = vmatprep.mubr.f32.mxu0 0.0
    %v187 = vand.u32 %v32, 4294901760
    %188 = vmatmul.mubr.f32.gmra.mrb[0].mxu0 %v187
    %v189 = vpop.f32.mrb[0].mxu0
    %v190 = vadd.f32 %v108, %v189
    %v191 = vpop.f32.mrb[0].mxu0
    %v192 = vadd.f32 %v110, %v191
    %193 = vdwg.mxu0
    %v194 = vand.u32 %v28, 4294901760
    %v195 = vsub.f32 %v28, %v194
    %196 = vmatprep.subr.mxu0 %v195
    %v197 = vand.u32 %v27, 4294901760
    %v198 = vsub.f32 %v27, %v197
    %199 = vmatpush1.msra.mxu0 %v198
    %200 = vmatprep.subr.mxu0 0.0
    %201 = vmatpush1.msra.mxu0 0.0
    %202 = vmatprep.subr.mxu0 0.0
    %203 = vmatpush1.msra.mxu0 0.0
    %204 = vmatprep.subr.mxu0 0.0
    %205 = vmatpush1.msra.mxu0 0.0
    %206 = vmatprep.subr.mxu0 0.0
    %207 = vmatpush1.msra.mxu0 0.0
    %208 = vmatprep.subr.mxu0 0.0
    %209 = vmatpush1.msra.mxu0 0.0
    %210 = vmatprep.subr.mxu0 0.0
    %211 = vmatpush1.msra.mxu0 0.0
    %212 = vmatprep.subr.mxu0 0.0
    %213 = vmatpush1.msra.mxu0 0.0
    %214 = vmatprep.subr.mxu0 0.0
    %215 = vmatpush1.msra.mxu0 0.0
    %216 = vmatprep.subr.mxu0 0.0
    %217 = vmatpush1.msra.mxu0 0.0
    %218 = vmatprep.subr.mxu0 0.0
    %219 = vmatpush1.msra.mxu0 0.0
    %220 = vmatprep.subr.mxu0 0.0
    %221 = vmatpush1.msra.mxu0 0.0
    %222 = vmatprep.subr.mxu0 0.0
    %223 = vmatpush1.msra.mxu0 0.0
    %224 = vmatprep.subr.mxu0 0.0
    %225 = vmatpush1.msra.mxu0 0.0
    %226 = vmatprep.subr.mxu0 0.0
    %227 = vmatpush1.msra.mxu0 0.0
    %228 = vmatprep.subr.mxu0 0.0
    %229 = vmatpush1.msra.mxu0 0.0
    %230 = vmatprep.subr.mxu0 0.0
    %231 = vmatpush1.msra.mxu0 0.0
    %232 = vmatprep.subr.mxu0 0.0
    %233 = vmatpush1.msra.mxu0 0.0
    %234 = vmatprep.subr.mxu0 0.0
    %235 = vmatpush1.msra.mxu0 0.0
    %236 = vmatprep.subr.mxu0 0.0
    %237 = vmatpush1.msra.mxu0 0.0
    %238 = vmatprep.subr.mxu0 0.0
    %239 = vmatpush1.msra.mxu0 0.0
    %240 = vmatprep.subr.mxu0 0.0
    %241 = vmatpush1.msra.mxu0 0.0
    %242 = vmatprep.subr.mxu0 0.0
    %243 = vmatpush1.msra.mxu0 0.0
    %244 = vmatprep.subr.mxu0 0.0
    %245 = vmatpush1.msra.mxu0 0.0
    %246 = vmatprep.subr.mxu0 0.0
    %247 = vmatpush1.msra.mxu0 0.0
    %248 = vmatprep.subr.mxu0 0.0
    %249 = vmatpush1.msra.mxu0 0.0
    %250 = vmatprep.subr.mxu0 0.0
    %251 = vmatpush1.msra.mxu0 0.0
    %252 = vmatprep.subr.mxu0 0.0
    %253 = vmatpush1.msra.mxu0 0.0
    %254 = vmatprep.subr.mxu0 0.0
    %255 = vmatpush1.msra.mxu0 0.0
    %256 = vmatprep.subr.mxu0 0.0
    %257 = vmatpush1.msra.mxu0 0.0
    %258 = vmatprep.subr.mxu0 0.0
    %259 = vmatpush1.msra.mxu0 0.0
    %260 = vmatprep.subr.mxu0 0.0
    %261 = vmatpush1.msra.mxu0 0.0
    %262 = vmatprep.mubr.f32.mxu0 0.0
    %v263 = vand.u32 %v32, 4294901760
    %v264 = vsub.f32 %v32, %v263
    %265 = vmatmul.mubr.f32.gmra.mrb[0].mxu0 %v264
    %v266 = vpop.f32.mrb[0].mxu0
    %v267 = vadd.f32 %v190, %v266
    %v268 = vpop.f32.mrb[0].mxu0
    %v269 = vadd.f32 %v192, %v268
    %270 = vdwg.mxu0
    %v271 = vand.u32 %v28, 4294901760
    %272 = vmatprep.subr.mxu0 %v271
    %v273 = vand.u32 %v27, 4294901760
    %274 = vmatpush1.msra.mxu0 %v273
    %275 = vmatprep.subr.mxu0 0.0
    %276 = vmatpush1.msra.mxu0 0.0
    %277 = vmatprep.subr.mxu0 0.0
    %278 = vmatpush1.msra.mxu0 0.0
    %279 = vmatprep.subr.mxu0 0.0
    %280 = vmatpush1.msra.mxu0 0.0
    %281 = vmatprep.subr.mxu0 0.0
    %282 = vmatpush1.msra.mxu0 0.0
    %283 = vmatprep.subr.mxu0 0.0
    %284 = vmatpush1.msra.mxu0 0.0
    %285 = vmatprep.subr.mxu0 0.0
    %286 = vmatpush1.msra.mxu0 0.0
    %287 = vmatprep.subr.mxu0 0.0
    %288 = vmatpush1.msra.mxu0 0.0
    %289 = vmatprep.subr.mxu0 0.0
    %290 = vmatpush1.msra.mxu0 0.0
    %291 = vmatprep.subr.mxu0 0.0
    %292 = vmatpush1.msra.mxu0 0.0
    %293 = vmatprep.subr.mxu0 0.0
    %294 = vmatpush1.msra.mxu0 0.0
    %295 = vmatprep.subr.mxu0 0.0
    %296 = vmatpush1.msra.mxu0 0.0
    %297 = vmatprep.subr.mxu0 0.0
    %298 = vmatpush1.msra.mxu0 0.0
    %299 = vmatprep.subr.mxu0 0.0
    %300 = vmatpush1.msra.mxu0 0.0
    %301 = vmatprep.subr.mxu0 0.0
    %302 = vmatpush1.msra.mxu0 0.0
    %303 = vmatprep.subr.mxu0 0.0
    %304 = vmatpush1.msra.mxu0 0.0
    %305 = vmatprep.subr.mxu0 0.0
    %306 = vmatpush1.msra.mxu0 0.0
    %307 = vmatprep.subr.mxu0 0.0
    %308 = vmatpush1.msra.mxu0 0.0
    %309 = vmatprep.subr.mxu0 0.0
    %310 = vmatpush1.msra.mxu0 0.0
    %311 = vmatprep.subr.mxu0 0.0
    %312 = vmatpush1.msra.mxu0 0.0
    %313 = vmatprep.subr.mxu0 0.0
    %314 = vmatpush1.msra.mxu0 0.0
    %315 = vmatprep.subr.mxu0 0.0
    %316 = vmatpush1.msra.mxu0 0.0
    %317 = vmatprep.subr.mxu0 0.0
    %318 = vmatpush1.msra.mxu0 0.0
    %319 = vmatprep.subr.mxu0 0.0
    %320 = vmatpush1.msra.mxu0 0.0
    %321 = vmatprep.subr.mxu0 0.0
    %322 = vmatpush1.msra.mxu0 0.0
    %323 = vmatprep.subr.mxu0 0.0
    %324 = vmatpush1.msra.mxu0 0.0
    %325 = vmatprep.subr.mxu0 0.0
    %326 = vmatpush1.msra.mxu0 0.0
    %327 = vmatprep.subr.mxu0 0.0
    %328 = vmatpush1.msra.mxu0 0.0
    %329 = vmatprep.subr.mxu0 0.0
    %330 = vmatpush1.msra.mxu0 0.0
    %331 = vmatprep.subr.mxu0 0.0
    %332 = vmatpush1.msra.mxu0 0.0
    %333 = vmatprep.subr.mxu0 0.0
    %334 = vmatpush1.msra.mxu0 0.0
    %335 = vmatprep.subr.mxu0 0.0
    %336 = vmatpush1.msra.mxu0 0.0
    %337 = vmatprep.mubr.f32.mxu0 0.0
    %v338 = vand.u32 %v32, 4294901760
    %v339 = vsub.f32 %v32, %v338
    %v340 = vand.u32 %v339, 4294901760
    %341 = vmatmul.mubr.f32.gmra.mrb[0].mxu0 %v340
    %v342 = vpop.f32.mrb[0].mxu0
    %v343 = vadd.f32 %v267, %v342
    %v344 = vpop.f32.mrb[0].mxu0
    %v345 = vadd.f32 %v269, %v344
    %346 = vdwg.mxu0
    %v347 = vand.u32 %v28, 4294901760
    %v348 = vsub.f32 %v28, %v347
    %v349 = vand.u32 %v348, 4294901760
    %350 = vmatprep.subr.mxu0 %v349
    %v351 = vand.u32 %v27, 4294901760
    %v352 = vsub.f32 %v27, %v351
    %v353 = vand.u32 %v352, 4294901760
    %354 = vmatpush1.msra.mxu0 %v353
    %355 = vmatprep.subr.mxu0 0.0
    %356 = vmatpush1.msra.mxu0 0.0
    %357 = vmatprep.subr.mxu0 0.0
    %358 = vmatpush1.msra.mxu0 0.0
    %359 = vmatprep.subr.mxu0 0.0
    %360 = vmatpush1.msra.mxu0 0.0
    %361 = vmatprep.subr.mxu0 0.0
    %362 = vmatpush1.msra.mxu0 0.0
    %363 = vmatprep.subr.mxu0 0.0
    %364 = vmatpush1.msra.mxu0 0.0
    %365 = vmatprep.subr.mxu0 0.0
    %366 = vmatpush1.msra.mxu0 0.0
    %367 = vmatprep.subr.mxu0 0.0
    %368 = vmatpush1.msra.mxu0 0.0
    %369 = vmatprep.subr.mxu0 0.0
    %370 = vmatpush1.msra.mxu0 0.0
    %371 = vmatprep.subr.mxu0 0.0
    %372 = vmatpush1.msra.mxu0 0.0
    %373 = vmatprep.subr.mxu0 0.0
    %374 = vmatpush1.msra.mxu0 0.0
    %375 = vmatprep.subr.mxu0 0.0
    %376 = vmatpush1.msra.mxu0 0.0
    %377 = vmatprep.subr.mxu0 0.0
    %378 = vmatpush1.msra.mxu0 0.0
    %379 = vmatprep.subr.mxu0 0.0
    %380 = vmatpush1.msra.mxu0 0.0
    %381 = vmatprep.subr.mxu0 0.0
    %382 = vmatpush1.msra.mxu0 0.0
    %383 = vmatprep.subr.mxu0 0.0
    %384 = vmatpush1.msra.mxu0 0.0
    %385 = vmatprep.subr.mxu0 0.0
    %386 = vmatpush1.msra.mxu0 0.0
    %387 = vmatprep.subr.mxu0 0.0
    %388 = vmatpush1.msra.mxu0 0.0
    %389 = vmatprep.subr.mxu0 0.0
    %390 = vmatpush1.msra.mxu0 0.0
    %391 = vmatprep.subr.mxu0 0.0
    %392 = vmatpush1.msra.mxu0 0.0
    %393 = vmatprep.subr.mxu0 0.0
    %394 = vmatpush1.msra.mxu0 0.0
    %395 = vmatprep.subr.mxu0 0.0
    %396 = vmatpush1.msra.mxu0 0.0
    %397 = vmatprep.subr.mxu0 0.0
    %398 = vmatpush1.msra.mxu0 0.0
    %399 = vmatprep.subr.mxu0 0.0
    %400 = vmatpush1.msra.mxu0 0.0
    %401 = vmatprep.subr.mxu0 0.0
    %402 = vmatpush1.msra.mxu0 0.0
    %403 = vmatprep.subr.mxu0 0.0
    %404 = vmatpush1.msra.mxu0 0.0
    %405 = vmatprep.subr.mxu0 0.0
    %406 = vmatpush1.msra.mxu0 0.0
    %407 = vmatprep.subr.mxu0 0.0
    %408 = vmatpush1.msra.mxu0 0.0
    %409 = vmatprep.subr.mxu0 0.0
    %410 = vmatpush1.msra.mxu0 0.0
    %411 = vmatprep.subr.mxu0 0.0
    %412 = vmatpush1.msra.mxu0 0.0
    %413 = vmatprep.subr.mxu0 0.0
    %414 = vmatpush1.msra.mxu0 0.0
    %415 = vmatprep.subr.mxu0 0.0
    %416 = vmatpush1.msra.mxu0 0.0
    %417 = vmatprep.mubr.f32.mxu0 0.0
    %v418 = vand.u32 %v32, 4294901760
    %419 = vmatmul.mubr.f32.gmra.mrb[0].mxu0 %v418
    %v420 = vpop.f32.mrb[0].mxu0
    %v421 = vadd.f32 %v343, %v420
    %v422 = vpop.f32.mrb[0].mxu0
    %v423 = vadd.f32 %v345, %v422
    %424 = vdwg.mxu0
    %v425 = vand.u32 %v28, 4294901760
    %426 = vmatprep.subr.mxu0 %v425
    %v427 = vand.u32 %v27, 4294901760
    %428 = vmatpush1.msra.mxu0 %v427
    %429 = vmatprep.subr.mxu0 0.0
    %430 = vmatpush1.msra.mxu0 0.0
    %431 = vmatprep.subr.mxu0 0.0
    %432 = vmatpush1.msra.mxu0 0.0
    %433 = vmatprep.subr.mxu0 0.0
    %434 = vmatpush1.msra.mxu0 0.0
    %435 = vmatprep.subr.mxu0 0.0
    %436 = vmatpush1.msra.mxu0 0.0
    %437 = vmatprep.subr.mxu0 0.0
    %438 = vmatpush1.msra.mxu0 0.0
    %439 = vmatprep.subr.mxu0 0.0
    %440 = vmatpush1.msra.mxu0 0.0
    %441 = vmatprep.subr.mxu0 0.0
    %442 = vmatpush1.msra.mxu0 0.0
    %443 = vmatprep.subr.mxu0 0.0
    %444 = vmatpush1.msra.mxu0 0.0
    %445 = vmatprep.subr.mxu0 0.0
    %446 = vmatpush1.msra.mxu0 0.0
    %447 = vmatprep.subr.mxu0 0.0
    %448 = vmatpush1.msra.mxu0 0.0
    %449 = vmatprep.subr.mxu0 0.0
    %450 = vmatpush1.msra.mxu0 0.0
    %451 = vmatprep.subr.mxu0 0.0
    %452 = vmatpush1.msra.mxu0 0.0
    %453 = vmatprep.subr.mxu0 0.0
    %454 = vmatpush1.msra.mxu0 0.0
    %455 = vmatprep.subr.mxu0 0.0
    %456 = vmatpush1.msra.mxu0 0.0
    %457 = vmatprep.subr.mxu0 0.0
    %458 = vmatpush1.msra.mxu0 0.0
    %459 = vmatprep.subr.mxu0 0.0
    %460 = vmatpush1.msra.mxu0 0.0
    %461 = vmatprep.subr.mxu0 0.0
    %462 = vmatpush1.msra.mxu0 0.0
    %463 = vmatprep.subr.mxu0 0.0
    %464 = vmatpush1.msra.mxu0 0.0
    %465 = vmatprep.subr.mxu0 0.0
    %466 = vmatpush1.msra.mxu0 0.0
    %467 = vmatprep.subr.mxu0 0.0
    %468 = vmatpush1.msra.mxu0 0.0
    %469 = vmatprep.subr.mxu0 0.0
    %470 = vmatpush1.msra.mxu0 0.0
    %471 = vmatprep.subr.mxu0 0.0
    %472 = vmatpush1.msra.mxu0 0.0
    %473 = vmatprep.subr.mxu0 0.0
    %474 = vmatpush1.msra.mxu0 0.0
    %475 = vmatprep.subr.mxu0 0.0
    %476 = vmatpush1.msra.mxu0 0.0
    %477 = vmatprep.subr.mxu0 0.0
    %478 = vmatpush1.msra.mxu0 0.0
    %479 = vmatprep.subr.mxu0 0.0
    %480 = vmatpush1.msra.mxu0 0.0
    %481 = vmatprep.subr.mxu0 0.0
    %482 = vmatpush1.msra.mxu0 0.0
    %483 = vmatprep.subr.mxu0 0.0
    %484 = vmatpush1.msra.mxu0 0.0
    %485 = vmatprep.subr.mxu0 0.0
    %486 = vmatpush1.msra.mxu0 0.0
    %487 = vmatprep.subr.mxu0 0.0
    %488 = vmatpush1.msra.mxu0 0.0
    %489 = vmatprep.subr.mxu0 0.0
    %490 = vmatpush1.msra.mxu0 0.0
    %491 = vmatprep.mubr.f32.mxu0 0.0
    %v492 = vand.u32 %v32, 4294901760
    %493 = vmatmul.mubr.f32.gmra.mrb[0].mxu0 %v492
    %v494 = vpop.f32.mrb[0].mxu0
    %v495 = vadd.f32 %v421, %v494
    %v496 = vpop.f32.mrb[0].mxu0
    %v497 = vadd.f32 %v423, %v496
    %498 = vdwg.mxu0
    %v499 = vld [vmem:[%s1] sm:$0xff]
    %501 = vset.pattern.permute.xlu0 0
    %502 = vperm.xlu0 %501, %v499
    %v503 = vpop.permute.xlu0 %502
    %v505 = vadd.f32 %v27, %v503
    %v506 = vadd.f32 %v28, %v503
    %v507 = vadd.f32 %v505, %v495
    %v508 = vadd.f32 %v506, %v497
    %509 = vst [vmem:[#allocation5] sm:$0xff] %v507
    %510 = vst [vmem:[#allocation5 + $0x8] sm:$0xff] %v508
    // Predicated region
    $region18: #{tpu_custom_call.1} parent=1 // pred_check
      _
    $region19: #{tpu_custom_call.1} parent=1 // pred_check_branch
      %512 = sbr.rel (0) target = $region21
    $region20: #{tpu_custom_call.1} parent=1 // pred_region
      %s514 = ssub.s32 256, 256
      %515 = vsyncadd [#allocation4], %s514
      %s517 = sshll.u32 [#allocation5], 4
      %s518 = int_to_ptr.vmem [resolvable:$true] %s517
      %520 = dma.vmem_to_hbm [thread:$0]  %s518, 256, %s3, [#allocation4]
    $region21: #{tpu_custom_call.1} parent=1 // pred_fallthru
      _
    // Predicated region
    $region22: #{tpu_custom_call.1} parent=1 // pred_check
      _
    $region23: #{tpu_custom_call.1} parent=1 // pred_check_branch
      %522 = sbr.rel (0) target = $region25
    $region24: #{tpu_custom_call.1} parent=1 // pred_region
      %523 = dma.done [#allocation4], 256
    $region25: #{tpu_custom_call.1} parent=1 // pred_fallthru
      _
    %524 = vsyncpa [#allocation3], 1
    %525 = vsyncpa [#allocation4], 1

</llo_original>
